<compile_context>
chip_gen: v5e
topology: v5e:2x2
jax: 0.10.0
libtpu: 0.0.40
codegen_flags: <defaults>
</compile_context>

<pallas_src>
import functools

import jax
import jax.numpy as jnp
from jax.experimental import pallas as pl
from jax.experimental.pallas import tpu as pltpu


def _decoder_kernel(x_ref, w1_ref, b1_ref, w2_ref, b2_ref, w3_ref, b3_ref, o_ref):
    cdt = w1_ref.dtype  # MXU input dtype: f32 or bf16
    # Layer 1: x @ W1 + b1 -> relu   (bias-add / relu in f32)
    h = jnp.dot(x_ref[...], w1_ref[...], preferred_element_type=jnp.float32)
    h = jnp.maximum(h + b1_ref[...], 0.0)
    # Layer 2
    h = jnp.dot(h.astype(cdt), w2_ref[...], preferred_element_type=jnp.float32)
    h = jnp.maximum(h + b2_ref[...], 0.0)
    # Output layer
    h = jnp.dot(h.astype(cdt), w3_ref[...], preferred_element_type=jnp.float32)
    o_ref[...] = jnp.maximum(h + b3_ref[...], 0.0).astype(o_ref.dtype)


def _round_up(x, m):
    return ((x + m - 1) // m) * m


def _pad_cols(w, b, target):
    """Zero-pad the output-feature (lane) dim of (in,out) weight and (1,out) bias."""
    cur = w.shape[1]
    if cur == target:
        return w, b
    return (jnp.pad(w, ((0, 0), (0, target - cur))),
            jnp.pad(b, ((0, 0), (0, target - cur))))


def _pad_rows(w, target):
    """Zero-pad the input-feature (sublane) dim of an (in,out) weight."""
    cur = w.shape[0]
    if cur == target:
        return w
    return jnp.pad(w, ((0, target - cur), (0, 0)))


@functools.partial(jax.jit, static_argnames=("shape", "use_bf16"))
def decoder_forward(features, params, shape, use_bf16=False):
    """Mirrors Decoder.forward(features, shape): 3x(Linear+ReLU) then 4-D reshape."""
    w1, b1, w2, b2, w3, b3 = (
        params["w1"], params["b1"], params["w2"],
        params["b2"], params["w3"], params["b3"],
    )
    assert features.shape[1] == w1.shape[0], "features dim must match layer1 in_features"

    n, in_dim = features.shape
    l1, l2, out_dim = w1.shape[1], w2.shape[1], w3.shape[1]

    # --- lane-dense hidden / output dims (zeros are exact through relu + zero rows) ---
    l1_pad = _round_up(max(l1, 128), 128)
    l2_pad = _round_up(max(l2, 128), 128)
    out_pad = _round_up(max(out_dim, 128), 128)

    w1p, b1p = _pad_cols(w1, b1, l1_pad)
    w2p, b2p = _pad_cols(w2, b2, l2_pad)
    w3p, b3p = _pad_cols(w3, b3, out_pad)
    w2p = _pad_rows(w2p, l1_pad)
    w3p = _pad_rows(w3p, l2_pad)

    # --- row tiling: TM rows per grid step (pipelined DMA, bounded VMEM) ---
    TM = 256
    if n < TM:
        TM = max(8, _round_up(n, 8))
    n_pad = _round_up(n, TM)
    x = features
    if n_pad != n:
        x = jnp.pad(x, ((0, n_pad - n), (0, 0)))

    # --- dtypes: bf16 MXU inputs on v6e/v7x if requested; f32 accumulation always ---
    cdt = jnp.bfloat16 if use_bf16 else jnp.float32
    xk = x.astype(cdt)
    w1k, w2k, w3k = w1p.astype(cdt), w2p.astype(cdt), w3p.astype(cdt)
    b1k, b2k, b3k = (b1p.astype(jnp.float32), b2p.astype(jnp.float32),
                     b3p.astype(jnp.float32))

    grid = (n_pad // TM,)
    vmem = pltpu.MemorySpace.VMEM

    itemsize = 2 if use_bf16 else 4
    flops = 2 * n_pad * (in_dim * l1_pad + l1_pad * l2_pad + l2_pad * out_pad)
    bytes_accessed = (
        (n_pad * in_dim + in_dim * l1_pad + l1_pad * l2_pad + l2_pad * out_pad) * itemsize
        + (l1_pad + l2_pad + out_pad) * 4
        + n_pad * out_pad * 4
    )

    out = pl.pallas_call(
        _decoder_kernel,
        out_shape=jax.ShapeDtypeStruct((n_pad, out_pad), jnp.float32),
        grid_spec=pltpu.PrefetchScalarGridSpec(
            num_scalar_prefetch=0,
            grid=grid,
            in_specs=[
                # activations: one (TM, in_dim) row tile per grid step
                pl.BlockSpec((TM, in_dim), lambda i: (i, 0), memory_space=vmem),
                # weights/biases: constant block index -> loaded once, VMEM-resident
                pl.BlockSpec(w1k.shape, lambda i: (0, 0), memory_space=vmem),
                pl.BlockSpec(b1k.shape, lambda i: (0, 0), memory_space=vmem),
                pl.BlockSpec(w2k.shape, lambda i: (0, 0), memory_space=vmem),
                pl.BlockSpec(b2k.shape, lambda i: (0, 0), memory_space=vmem),
                pl.BlockSpec(w3k.shape, lambda i: (0, 0), memory_space=vmem),
                pl.BlockSpec(b3k.shape, lambda i: (0, 0), memory_space=vmem),
            ],
            out_specs=pl.BlockSpec((TM, out_pad), lambda i: (i, 0), memory_space=vmem),
        ),
        compiler_params=pltpu.CompilerParams(
            dimension_semantics=("parallel",),      # row axis fully independent
            vmem_limit_bytes=32 * 1024 * 1024,      # safe on v5e/v6e/v7x
        ),
        cost_estimate=pl.CostEstimate(
            flops=flops, transcendentals=0, bytes_accessed=bytes_accessed),
    )(xk, w1k, b1k, w2k, b2k, w3k, b3k)

    out = out[:n, :out_dim]                         # drop row / lane padding
    return jnp.reshape(out, shape)                  # torch .view(shape[0..3])


def init_params(key, input_shape, layer1_shape, layer2_shape, output_shape):
    """Deterministic init mimicking torch nn.Linear default (uniform +/- 1/sqrt(fan_in))."""
    ks = jax.random.split(key, 6)

    def lin(kw, kb, fan_in, fan_out):
        bound = 1.0 / jnp.sqrt(fan_in)
        # Stored as (in, out) -- transposed vs torch's (out, in) -- so kernel does x @ W.
        w = jax.random.uniform(kw, (fan_in, fan_out), jnp.float32, -bound, bound)
        b = jax.random.uniform(kb, (1, fan_out), jnp.float32, -bound, bound)
        return w, b

    w1, b1 = lin(ks[0], ks[1], input_shape, layer1_shape)
    w2, b2 = lin(ks[2], ks[3], layer1_shape, layer2_shape)
    w3, b3 = lin(ks[4], ks[5], layer2_shape, output_shape)
    return {"w1": w1, "b1": b1, "w2": w2, "b2": b2, "w3": w3, "b3": b3}


def _reference(features, params, shape):
    h = jnp.maximum(features @ params["w1"] + params["b1"], 0.0)
    h = jnp.maximum(h @ params["w2"] + params["b2"], 0.0)
    return jnp.maximum(h @ params["w3"] + params["b3"], 0.0).reshape(shape)


if __name__ == "__main__":
    key = jax.random.PRNGKey(0)
    k_x, k_p, k_x2 = jax.random.split(key, 3)

    # Small shapes consistent with the module: code (8,16) -> 48 -> 64 -> 256,
    # reconstructed and reshaped to (8, 1, 16, 16).
    batch = 8
    input_shape, layer1_shape, layer2_shape, output_shape = 16, 48, 64, 256
    target_shape = (batch, 1, 16, 16)

    features = jax.random.normal(k_x, (batch, input_shape), jnp.float32)
    params = init_params(k_p, input_shape, layer1_shape, layer2_shape, output_shape)

    # f32 path
    recon = jax.block_until_ready(decoder_forward(features, params, target_shape))
    ref = _reference(features, params, target_shape)
    assert recon.shape == target_shape
    assert jnp.allclose(recon, ref, atol=1e-5, rtol=1e-5)

    # bf16 MXU-input path (v6e/v7x bandwidth optimization), f32 accumulation retained.
    recon_bf16 = jax.block_until_ready(
        decoder_forward(features, params, target_shape, use_bf16=True))
    assert recon_bf16.shape == target_shape
    assert jnp.allclose(recon_bf16, ref, atol=1e-1, rtol=1e-1)

    # Larger batch exercising the multi-tile row grid + row padding (300 -> 2 tiles of 256).
    batch2 = 300
    target_shape2 = (batch2, 1, 16, 16)
    features2 = jax.random.normal(k_x2, (batch2, input_shape), jnp.float32)
    recon2 = jax.block_until_ready(decoder_forward(features2, params, target_shape2))
    ref2 = _reference(features2, params, target_shape2)
    assert recon2.shape == target_shape2
    assert jnp.allclose(recon2, ref2, atol=1e-5, rtol=1e-5)

    print("KERNEL_OK")
</pallas_src>

<mosaic_0001>
module attributes {stable_mosaic.version = 11 : i64} {
  func.func @_decoder_kernel(%arg0: i32, %arg1: memref<8x16xf32, #tpu.memory_space<vmem>>, %arg2: memref<16x128xf32, #tpu.memory_space<vmem>>, %arg3: memref<1x128xf32, #tpu.memory_space<vmem>>, %arg4: memref<128x128xf32, #tpu.memory_space<vmem>>, %arg5: memref<1x128xf32, #tpu.memory_space<vmem>>, %arg6: memref<128x256xf32, #tpu.memory_space<vmem>>, %arg7: memref<1x256xf32, #tpu.memory_space<vmem>>, %arg8: memref<8x256xf32, #tpu.memory_space<vmem>>) attributes {dimension_semantics = [#tpu.dimension_semantics<parallel>], iteration_bounds = array<i64: 1>, scalar_prefetch = 0 : i64, scratch_operands = 0 : i64, tpu.core_type = #tpu.core_type<tc>, window_params = [{transform_indices = @transform_0, window_bounds = array<i64: 8, 16>}, {pipeline_mode = #tpu.pipeline_mode<synchronous>, transform_indices = @transform_1, window_bounds = array<i64: 16, 128>}, {pipeline_mode = #tpu.pipeline_mode<synchronous>, transform_indices = @transform_2, window_bounds = array<i64: 1, 128>}, {pipeline_mode = #tpu.pipeline_mode<synchronous>, transform_indices = @transform_3, window_bounds = array<i64: 128, 128>}, {pipeline_mode = #tpu.pipeline_mode<synchronous>, transform_indices = @transform_4, window_bounds = array<i64: 1, 128>}, {pipeline_mode = #tpu.pipeline_mode<synchronous>, transform_indices = @transform_5, window_bounds = array<i64: 128, 256>}, {pipeline_mode = #tpu.pipeline_mode<synchronous>, transform_indices = @transform_6, window_bounds = array<i64: 1, 256>}, {transform_indices = @transform_7, window_bounds = array<i64: 8, 256>}]} {
    %c0 = arith.constant 0 : index
    %c0_0 = arith.constant 0 : index
    %0 = vector.load %arg1[%c0, %c0_0] : memref<8x16xf32, #tpu.memory_space<vmem>>, vector<8x16xf32>
    %c0_1 = arith.constant 0 : index
    %c0_2 = arith.constant 0 : index
    %1 = vector.load %arg2[%c0_1, %c0_2] : memref<16x128xf32, #tpu.memory_space<vmem>>, vector<16x128xf32>
    %cst = arith.constant dense<0.000000e+00> : vector<8x128xf32>
    %2 = tpu.matmul %0, %1, %cst {dimension_numbers = #tpu.dot_dimension_numbers<[1], [0], [0], [1], [0, 0, 1, 1], [], []>} : vector<8x16xf32>, vector<16x128xf32>, vector<8x128xf32> -> vector<8x128xf32>
    %c0_3 = arith.constant 0 : index
    %c0_4 = arith.constant 0 : index
    %3 = vector.load %arg3[%c0_3, %c0_4] : memref<1x128xf32, #tpu.memory_space<vmem>>, vector<1x128xf32>
    %4 = vector.broadcast %3 : vector<1x128xf32> to vector<8x128xf32>
    %5 = arith.addf %2, %4 : vector<8x128xf32>
    %cst_5 = arith.constant 0.000000e+00 : f32
    %6 = vector.broadcast %cst_5 : f32 to vector<8x128xf32>
    %7 = arith.maximumf %5, %6 : vector<8x128xf32>
    %c0_6 = arith.constant 0 : index
    %c0_7 = arith.constant 0 : index
    %8 = vector.load %arg4[%c0_6, %c0_7] : memref<128x128xf32, #tpu.memory_space<vmem>>, vector<128x128xf32>
    %cst_8 = arith.constant dense<0.000000e+00> : vector<8x128xf32>
    %9 = tpu.matmul %7, %8, %cst_8 {dimension_numbers = #tpu.dot_dimension_numbers<[1], [0], [0], [1], [0, 0, 1, 1], [], []>} : vector<8x128xf32>, vector<128x128xf32>, vector<8x128xf32> -> vector<8x128xf32>
    %c0_9 = arith.constant 0 : index
    %c0_10 = arith.constant 0 : index
    %10 = vector.load %arg5[%c0_9, %c0_10] : memref<1x128xf32, #tpu.memory_space<vmem>>, vector<1x128xf32>
    %11 = vector.broadcast %10 : vector<1x128xf32> to vector<8x128xf32>
    %12 = arith.addf %9, %11 : vector<8x128xf32>
    %cst_11 = arith.constant 0.000000e+00 : f32
    %13 = vector.broadcast %cst_11 : f32 to vector<8x128xf32>
    %14 = arith.maximumf %12, %13 : vector<8x128xf32>
    %c0_12 = arith.constant 0 : index
    %c0_13 = arith.constant 0 : index
    %15 = vector.load %arg6[%c0_12, %c0_13] : memref<128x256xf32, #tpu.memory_space<vmem>>, vector<128x256xf32>
    %cst_14 = arith.constant dense<0.000000e+00> : vector<8x256xf32>
    %16 = tpu.matmul %14, %15, %cst_14 {dimension_numbers = #tpu.dot_dimension_numbers<[1], [0], [0], [1], [0, 0, 1, 1], [], []>} : vector<8x128xf32>, vector<128x256xf32>, vector<8x256xf32> -> vector<8x256xf32>
    %c0_15 = arith.constant 0 : index
    %c0_16 = arith.constant 0 : index
    %17 = vector.load %arg7[%c0_15, %c0_16] : memref<1x256xf32, #tpu.memory_space<vmem>>, vector<1x256xf32>
    %18 = vector.broadcast %17 : vector<1x256xf32> to vector<8x256xf32>
    %19 = arith.addf %16, %18 : vector<8x256xf32>
    %cst_17 = arith.constant 0.000000e+00 : f32
    %20 = vector.broadcast %cst_17 : f32 to vector<8x256xf32>
    %21 = arith.maximumf %19, %20 : vector<8x256xf32>
    %c0_18 = arith.constant 0 : index
    %c0_19 = arith.constant 0 : index
    %22 = vector.load %arg8[%c0_18, %c0_19] : memref<8x256xf32, #tpu.memory_space<vmem>>, vector<8x256xf32>
    tpu.vector_store %arg8[%c0_18, %c0_19], %21 {strides = array<i32>} : memref<8x256xf32, #tpu.memory_space<vmem>>, vector<8x256xf32>,
    return
  }
  func.func @transform_0(%arg0: i32) -> (i32, i32) {
    %c0_i32 = arith.constant 0 : i32
    %c0_i32_0 = arith.constant 0 : i32
    return %arg0, %c0_i32 : i32, i32
  }
  func.func @transform_1(%arg0: i32) -> (i32, i32) {
    %c0_i32 = arith.constant 0 : i32
    %c0_i32_0 = arith.constant 0 : i32
    %c0_i32_1 = arith.constant 0 : i32
    return %c0_i32, %c0_i32_0 : i32, i32
  }
  func.func @transform_2(%arg0: i32) -> (i32, i32) {
    %c0_i32 = arith.constant 0 : i32
    %c0_i32_0 = arith.constant 0 : i32
    %c0_i32_1 = arith.constant 0 : i32
    return %c0_i32, %c0_i32_0 : i32, i32
  }
  func.func @transform_3(%arg0: i32) -> (i32, i32) {
    %c0_i32 = arith.constant 0 : i32
    %c0_i32_0 = arith.constant 0 : i32
    %c0_i32_1 = arith.constant 0 : i32
    return %c0_i32, %c0_i32_0 : i32, i32
  }
  func.func @transform_4(%arg0: i32) -> (i32, i32) {
    %c0_i32 = arith.constant 0 : i32
    %c0_i32_0 = arith.constant 0 : i32
    %c0_i32_1 = arith.constant 0 : i32
    return %c0_i32, %c0_i32_0 : i32, i32
  }
  func.func @transform_5(%arg0: i32) -> (i32, i32) {
    %c0_i32 = arith.constant 0 : i32
    %c0_i32_0 = arith.constant 0 : i32
    %c0_i32_1 = arith.constant 0 : i32
    return %c0_i32, %c0_i32_0 : i32, i32
  }
  func.func @transform_6(%arg0: i32) -> (i32, i32) {
    %c0_i32 = arith.constant 0 : i32
    %c0_i32_0 = arith.constant 0 : i32
    %c0_i32_1 = arith.constant 0 : i32
    return %c0_i32, %c0_i32_0 : i32, i32
  }
  func.func @transform_7(%arg0: i32) -> (i32, i32) {
    %c0_i32 = arith.constant 0 : i32
    %c0_i32_0 = arith.constant 0 : i32
    return %arg0, %c0_i32 : i32, i32
  }
}

</mosaic_0001>

<llo_original>
// kernel: decoder_forward.1
$region0: #{decoder_forward.1}
  #allocation0 [shape = 'u32[]', space=smem, size = 0x4, offset = 0x4, fixed_abs, tag = 'smem constant byte address 0x4 - core index']
  #allocation1 [shape = 'u32[72,128]{1,0:T(1,128)}', space=vmem, size = 0x9000, scoped, tag = 'internal scratch']
  %s0 = inlined_call_operand.vmem [shape: f32[8,16], index: 0, kind: input, shape index: {}]
  %s1 = inlined_call_operand.vmem [shape: f32[16,128], index: 1, kind: input, shape index: {}]
  %s2 = inlined_call_operand.vmem [shape: f32[1,128], index: 2, kind: input, shape index: {}]
  %s3 = inlined_call_operand.vmem [shape: f32[128,128], index: 3, kind: input, shape index: {}]
  %s4 = inlined_call_operand.vmem [shape: f32[1,128], index: 4, kind: input, shape index: {}]
  %s5 = inlined_call_operand.vmem [shape: f32[128,256], index: 5, kind: input, shape index: {}]
  %s6 = inlined_call_operand.vmem [shape: f32[1,256], index: 6, kind: input, shape index: {}]
  %s7 = inlined_call_operand.vmem [shape: f32[8,256], index: 7, kind: output, shape index: {}]
  %s8 = sld [smem:[#allocation0]]
  $region38: #{decoder_forward.1} parent=0
    _
  %s10 = ssub.s32 1, %s8
  %s11 = scalar_select 0, %s10, %s8
  // Predicated region
  $region2: #{decoder_forward.1} parent=0 // pred_check
    _
  $region3: #{decoder_forward.1} parent=0 // pred_check_branch
    %13 = sbr.rel (0) target = $region5
  $region4: #{decoder_forward.1} parent=0 // pred_region
    _
  $region5: #{decoder_forward.1} parent=0 // pred_fallthru
    _
  // Predicated region
  $region6: #{decoder_forward.1} parent=0 // pred_check
    _
  $region7: #{decoder_forward.1} parent=0 // pred_check_branch
    %15 = sbr.rel (0) target = $region9
  $region8: #{decoder_forward.1} parent=0 // pred_region
    _
  $region9: #{decoder_forward.1} parent=0 // pred_fallthru
    _
  // Predicated region
  $region10: #{decoder_forward.1} parent=0 // pred_check
    _
  $region11: #{decoder_forward.1} parent=0 // pred_check_branch
    %17 = sbr.rel (0) target = $region13
  $region12: #{decoder_forward.1} parent=0 // pred_region
    _
  $region13: #{decoder_forward.1} parent=0 // pred_fallthru
    _
  // Predicated region
  $region14: #{decoder_forward.1} parent=0 // pred_check
    _
  $region15: #{decoder_forward.1} parent=0 // pred_check_branch
    %19 = sbr.rel (0) target = $region17
  $region16: #{decoder_forward.1} parent=0 // pred_region
    _
  $region17: #{decoder_forward.1} parent=0 // pred_fallthru
    _
  // Predicated region
  $region18: #{decoder_forward.1} parent=0 // pred_check
    _
  $region19: #{decoder_forward.1} parent=0 // pred_check_branch
    %21 = sbr.rel (0) target = $region21
  $region20: #{decoder_forward.1} parent=0 // pred_region
    _
  $region21: #{decoder_forward.1} parent=0 // pred_fallthru
    _
  // Predicated region
  $region22: #{decoder_forward.1} parent=0 // pred_check
    _
  $region23: #{decoder_forward.1} parent=0 // pred_check_branch
    %23 = sbr.rel (0) target = $region25
  $region24: #{decoder_forward.1} parent=0 // pred_region
    _
  $region25: #{decoder_forward.1} parent=0 // pred_fallthru
    _
  // Predicated region
  $region26: #{decoder_forward.1} parent=0 // pred_check
    _
  $region27: #{decoder_forward.1} parent=0 // pred_check_branch
    %25 = sbr.rel (0) target = $region29
  $region28: #{decoder_forward.1} parent=0 // pred_region
    _
  $region29: #{decoder_forward.1} parent=0 // pred_fallthru
    _
  %v26 = vld [vmem:[%s0] sm:$0xff]
  %v27 = vld [vmem:[%s1] sm:$0xff]
  %v28 = vld [vmem:[%s1 + $0x8] sm:$0xff]
  %v29 = vld [vmem:[%s2] sm:$0x1]
  %v31 = vperm.slane %v29, 0
  %vm33 = vcmask 130048
  %v35 = vsel %vm33, %v26, 0
  %37 = vmatpush.msra.mxu0 0.0
  %38 = vmatpush.msra.mxu0 0.0
  %39 = vmatpush.msra.mxu0 0.0
  %40 = vmatpush.msra.mxu0 0.0
  %41 = vmatpush.msra.mxu0 0.0
  %42 = vmatpush.msra.mxu0 0.0
  %43 = vmatpush.msra.mxu0 0.0
  %44 = vmatpush.msra.mxu0 0.0
  %45 = vmatpush.msra.mxu0 0.0
  %46 = vmatpush.msra.mxu0 0.0
  %47 = vmatpush.msra.mxu0 0.0
  %48 = vmatpush.msra.mxu0 0.0
  %49 = vmatpush.msra.mxu0 0.0
  %50 = vmatpush.msra.mxu0 0.0
  %51 = vmatpush.msra.mxu0 %v28
  %52 = vmatpush.msra.mxu0 %v27
  %53 = vmatmul.f32.gmra.mxu0 %v35
  %v54 = vpop.f32.mrf.mxu0
  %v55 = vadd.f32 %v31, %v54
  %56 = vdwg.mxu0
  %v57 = vmax.f32 %v55, 0.0
  %v58 = vld [vmem:[%s3] sm:$0xff]
  %v59 = vld [vmem:[%s3 + $0x8] sm:$0xff]
  %v60 = vld [vmem:[%s3 + $0x10] sm:$0xff]
  %v61 = vld [vmem:[%s3 + $0x18] sm:$0xff]
  %v62 = vld [vmem:[%s3 + $0x20] sm:$0xff]
  %v63 = vld [vmem:[%s3 + $0x28] sm:$0xff]
  %v64 = vld [vmem:[%s3 + $0x30] sm:$0xff]
  %v65 = vld [vmem:[%s3 + $0x38] sm:$0xff]
  %v66 = vld [vmem:[%s3 + $0x40] sm:$0xff]
  %v67 = vld [vmem:[%s3 + $0x48] sm:$0xff]
  %v68 = vld [vmem:[%s3 + $0x50] sm:$0xff]
  %v69 = vld [vmem:[%s3 + $0x58] sm:$0xff]
  %v70 = vld [vmem:[%s3 + $0x60] sm:$0xff]
  %v71 = vld [vmem:[%s3 + $0x68] sm:$0xff]
  %v72 = vld [vmem:[%s3 + $0x70] sm:$0xff]
  %v73 = vld [vmem:[%s3 + $0x78] sm:$0xff]
  %v74 = vld [vmem:[%s4] sm:$0x1]
  %v76 = vperm.slane %v74, 0
  %78 = vmatpush.msra.mxu0 %v73
  %79 = vmatpush.msra.mxu0 %v72
  %80 = vmatpush.msra.mxu0 %v71
  %81 = vmatpush.msra.mxu0 %v70
  %82 = vmatpush.msra.mxu0 %v69
  %83 = vmatpush.msra.mxu0 %v68
  %84 = vmatpush.msra.mxu0 %v67
  %85 = vmatpush.msra.mxu0 %v66
  %86 = vmatpush.msra.mxu0 %v65
  %87 = vmatpush.msra.mxu0 %v64
  %88 = vmatpush.msra.mxu0 %v63
  %89 = vmatpush.msra.mxu0 %v62
  %90 = vmatpush.msra.mxu0 %v61
  %91 = vmatpush.msra.mxu0 %v60
  %92 = vmatpush.msra.mxu0 %v59
  %93 = vmatpush.msra.mxu0 %v58
  %94 = vmatmul.f32.gmra.mxu0 %v57
  %v95 = vpop.f32.mrf.mxu0
  %v96 = vadd.f32 %v76, %v95
  %97 = vdwg.mxu0
  %v98 = vmax.f32 %v96, 0.0
  %v99 = vld [vmem:[%s5] sm:$0xff]
  %v100 = vld [vmem:[%s5 + $0x8] sm:$0xff]
  %v101 = vld [vmem:[%s5 + $0x10] sm:$0xff]
  %v102 = vld [vmem:[%s5 + $0x18] sm:$0xff]
  %v103 = vld [vmem:[%s5 + $0x20] sm:$0xff]
  %v104 = vld [vmem:[%s5 + $0x28] sm:$0xff]
  %v105 = vld [vmem:[%s5 + $0x30] sm:$0xff]
  %v106 = vld [vmem:[%s5 + $0x38] sm:$0xff]
  %v107 = vld [vmem:[%s5 + $0x40] sm:$0xff]
  %v108 = vld [vmem:[%s5 + $0x48] sm:$0xff]
  %v109 = vld [vmem:[%s5 + $0x50] sm:$0xff]
  %v110 = vld [vmem:[%s5 + $0x58] sm:$0xff]
  %v111 = vld [vmem:[%s5 + $0x60] sm:$0xff]
  %v112 = vld [vmem:[%s5 + $0x68] sm:$0xff]
  %v113 = vld [vmem:[%s5 + $0x70] sm:$0xff]
  %v114 = vld [vmem:[%s5 + $0x78] sm:$0xff]
  %v115 = vld [vmem:[%s5 + $0x80] sm:$0xff]
  %v116 = vld [vmem:[%s5 + $0x88] sm:$0xff]
  %v117 = vld [vmem:[%s5 + $0x90] sm:$0xff]
  %v118 = vld [vmem:[%s5 + $0x98] sm:$0xff]
  %v119 = vld [vmem:[%s5 + $0xa0] sm:$0xff]
  %v120 = vld [vmem:[%s5 + $0xa8] sm:$0xff]
  %v121 = vld [vmem:[%s5 + $0xb0] sm:$0xff]
  %v122 = vld [vmem:[%s5 + $0xb8] sm:$0xff]
  %v123 = vld [vmem:[%s5 + $0xc0] sm:$0xff]
  %v124 = vld [vmem:[%s5 + $0xc8] sm:$0xff]
  %v125 = vld [vmem:[%s5 + $0xd0] sm:$0xff]
  %v126 = vld [vmem:[%s5 + $0xd8] sm:$0xff]
  %v127 = vld [vmem:[%s5 + $0xe0] sm:$0xff]
  %v128 = vld [vmem:[%s5 + $0xe8] sm:$0xff]
  %v129 = vld [vmem:[%s5 + $0xf0] sm:$0xff]
  %v130 = vld [vmem:[%s5 + $0xf8] sm:$0xff]
  %v131 = vld [vmem:[%s6] sm:$0x3]
  %v133 = vperm.slane %v131, 0
  %v134 = vperm.slane %v131, 1
  %137 = vmatpush.msra.mxu0 %v129
  %138 = vmatpush.msra.mxu0 %v127
  %139 = vmatpush.msra.mxu0 %v125
  %140 = vmatpush.msra.mxu0 %v123
  %141 = vmatpush.msra.mxu0 %v121
  %142 = vmatpush.msra.mxu0 %v119
  %143 = vmatpush.msra.mxu0 %v117
  %144 = vmatpush.msra.mxu0 %v115
  %145 = vmatpush.msra.mxu0 %v113
  %146 = vmatpush.msra.mxu0 %v111
  %147 = vmatpush.msra.mxu0 %v109
  %148 = vmatpush.msra.mxu0 %v107
  %149 = vmatpush.msra.mxu0 %v105
  %150 = vmatpush.msra.mxu0 %v103
  %151 = vmatpush.msra.mxu0 %v101
  %152 = vmatpush.msra.mxu0 %v99
  %153 = vmatmul.f32.gmra.mxu0 %v98
  %v154 = vpop.f32.mrf.mxu0
  %v155 = vadd.f32 %v133, %v154
  %156 = vdwg.mxu0
  %157 = vmatpush.msra.mxu0 %v130
  %158 = vmatpush.msra.mxu0 %v128
  %159 = vmatpush.msra.mxu0 %v126
  %160 = vmatpush.msra.mxu0 %v124
  %161 = vmatpush.msra.mxu0 %v122
  %162 = vmatpush.msra.mxu0 %v120
  %163 = vmatpush.msra.mxu0 %v118
  %164 = vmatpush.msra.mxu0 %v116
  %165 = vmatpush.msra.mxu0 %v114
  %166 = vmatpush.msra.mxu0 %v112
  %167 = vmatpush.msra.mxu0 %v110
  %168 = vmatpush.msra.mxu0 %v108
  %169 = vmatpush.msra.mxu0 %v106
  %170 = vmatpush.msra.mxu0 %v104
  %171 = vmatpush.msra.mxu0 %v102
  %172 = vmatpush.msra.mxu0 %v100
  %173 = vmatmul.f32.gmra.mxu0 %v98
  %v174 = vpop.f32.mrf.mxu0
  %v175 = vadd.f32 %v134, %v174
  %176 = vdwg.mxu0
  %v177 = vmax.f32 %v155, 0.0
  %v178 = vmax.f32 %v175, 0.0
  %179 = vst [vmem:[%s7] sm:$0xff] %v177
  %180 = vst [vmem:[%s7 + $0x8] sm:$0xff] %v178
  // Predicated region
  $region30: #{decoder_forward.1} parent=0 // pred_check
    _
  $region31: #{decoder_forward.1} parent=0 // pred_check_branch
    %182 = sbr.rel (0) target = $region33
  $region32: #{decoder_forward.1} parent=0 // pred_region
    _
  $region33: #{decoder_forward.1} parent=0 // pred_fallthru
    _
  // Predicated region
  $region34: #{decoder_forward.1} parent=0 // pred_check
    _
  $region35: #{decoder_forward.1} parent=0 // pred_check_branch
    %184 = sbr.rel (0) target = $region37
  $region36: #{decoder_forward.1} parent=0 // pred_region
    _
  $region37: #{decoder_forward.1} parent=0 // pred_fallthru
    _

</llo_original>
